<compile_context>
chip_gen: v5e
topology: v5e:2x2
jax: 0.10.0
libtpu: 0.0.40
codegen_flags: <defaults>
</compile_context>

<pallas_src>
from math import sqrt

import jax
import jax.numpy as jnp
from jax.experimental import pallas as pl
from jax.experimental.pallas import tpu as pltpu


def _round_up(x: int, m: int) -> int:
    return (x + m - 1) // m * m


def _swiglu_kernel(x_ref, wgh_ref, wo_ref, o_ref, acc_ref):
    """One (row-tile, hidden-tile) grid step.

    x_ref   : (tm, d_model_pad)       activation row tile (resident across hidden axis)
    wgh_ref : (d_model_pad, 2*th)     fused [gate | hidden] weight tile
    wo_ref  : (th, d_model_pad)       output-projection weight tile
    o_ref   : (tm, d_model_pad)       output tile (written on the last hidden step)
    acc_ref : (tm, d_model_pad) f32   accumulator scratch (lives across the hidden axis)
    """
    hid = pl.program_id(1)

    @pl.when(hid == 0)
    def _():
        acc_ref[...] = jnp.zeros_like(acc_ref)

    x = x_ref[...]
    # One fused MXU matmul covers both the gate and hidden projections of this tile.
    gh = jnp.dot(x, wgh_ref[...], preferred_element_type=jnp.float32)   # (tm, 2*th)
    th = gh.shape[1] // 2
    g = gh[:, :th]            # lane-aligned slice (th is a multiple of 128)
    h = gh[:, th:]
    act = (g * jax.nn.sigmoid(g)) * h                                   # silu(gate)*hidden, f32

    # Partial output projection for this hidden tile, accumulated in f32.
    acc_ref[...] += jnp.dot(act.astype(wo_ref.dtype), wo_ref[...],
                            preferred_element_type=jnp.float32)

    @pl.when(hid == pl.num_programs(1) - 1)
    def _():
        o_ref[...] = acc_ref[...].astype(o_ref.dtype)


def prepare_swiglu_weights(w_gate, w_hidden, w_out, *, th, d_model_pad, d_hidden_pad,
                           dtype):
    """Transpose / fuse / pad the PyTorch-layout weights for the kernel.

    Call this ONCE outside the training/inference loop so the transposes and the
    fused [gate|hidden] packing are not re-materialized in HBM on every forward.

    w_gate, w_hidden: (d_hidden, d_model);  w_out: (d_model, d_hidden)
    Returns:
      wgh : (d_model_pad, 2*d_hidden_pad)  per hidden tile h, cols = [gate_h | hidden_h]
      wo_t: (d_hidden_pad, d_model_pad)
    """
    d_hidden, d_model = w_gate.shape
    pad_dm = d_model_pad - d_model
    pad_dh = d_hidden_pad - d_hidden

    wg_t = jnp.pad(jnp.asarray(w_gate, dtype).T, ((0, pad_dm), (0, pad_dh)))
    wh_t = jnp.pad(jnp.asarray(w_hidden, dtype).T, ((0, pad_dm), (0, pad_dh)))

    nh = d_hidden_pad // th
    # Per hidden tile h, columns [h*2*th : (h+1)*2*th] are [gate_tile | hidden_tile],
    # so one (d_model_pad, 2*th) BlockSpec block feeds a single fused matmul per step.
    wgh = jnp.concatenate(
        [wg_t.reshape(d_model_pad, nh, th), wh_t.reshape(d_model_pad, nh, th)],
        axis=2,
    ).reshape(d_model_pad, 2 * d_hidden_pad)

    wo_t = jnp.pad(jnp.asarray(w_out, dtype).T, ((0, pad_dh), (0, pad_dm)))
    return wgh, wo_t


def swiglu_pallas(x, w_gate, w_hidden, w_out, *, tm=256, th=512, compute_dtype=None):
    """x: (batch, seq, d_model). Weights in PyTorch nn.Linear layout:
       w_gate, w_hidden: (d_hidden, d_model); w_out: (d_model, d_hidden).

    compute_dtype: dtype used on the MXU (e.g. jnp.bfloat16 for v5e/v6e/v7x speed);
    defaults to x.dtype. Accumulation is always f32.
    """
    batch, seq, d_model = x.shape
    d_hidden = w_gate.shape[0]
    n = batch * seq

    compute_dtype = jnp.dtype(x.dtype if compute_dtype is None else compute_dtype)
    out_dtype = jnp.dtype(x.dtype)

    # Sublane packing for the row dimension: 8 rows per sublane group at 32-bit,
    # 16 at 16-bit, etc.
    sub = 8 * (4 // max(1, compute_dtype.itemsize))

    # Tile sizes, clamped for small problems and padded to hardware-friendly multiples.
    d_model_pad = _round_up(d_model, 128)                 # lane-dense last dims
    th = max(128, _round_up(min(th, d_hidden), 128))      # hidden tile, multiple of 128
    d_hidden_pad = _round_up(d_hidden, th)
    tm = max(sub, _round_up(min(tm, n), sub))             # row tile, multiple of sublane
    n_pad = _round_up(n, tm)

    # Pad activations (zero padding is exact: padded rows/cols contribute nothing).
    x2 = jnp.asarray(x, compute_dtype).reshape(n, d_model)
    if n_pad != n or d_model_pad != d_model:
        x2 = jnp.pad(x2, ((0, n_pad - n), (0, d_model_pad - d_model)))

    # One-time weight prep (fuse gate+hidden, transpose, pad). Hoist out of hot loops.
    wgh, wo_t = prepare_swiglu_weights(
        w_gate, w_hidden, w_out,
        th=th, d_model_pad=d_model_pad, d_hidden_pad=d_hidden_pad, dtype=compute_dtype)

    grid = (n_pad // tm, d_hidden_pad // th)

    # Advisory cost estimate for the XLA scheduler.
    ci = compute_dtype.itemsize
    flops = 6 * n_pad * d_model_pad * d_hidden_pad          # 2*N*dm*2*dh + 2*N*dh*dm
    transcendentals = n_pad * d_hidden_pad                  # sigmoid per hidden element
    bytes_accessed = ((x2.size + wgh.size + wo_t.size) * ci
                      + n_pad * d_model_pad * out_dtype.itemsize)

    # VMEM budget: double-buffered input tiles + double-buffered output tile + f32 acc.
    vmem_est = (2 * (tm * d_model_pad + d_model_pad * 2 * th + th * d_model_pad) * ci
                + 2 * tm * d_model_pad * out_dtype.itemsize
                + tm * d_model_pad * 4)
    vmem_limit = int(min(max(2 * vmem_est, 32 << 20), 64 << 20))

    out2 = pl.pallas_call(
        _swiglu_kernel,
        out_shape=jax.ShapeDtypeStruct((n_pad, d_model_pad), out_dtype),
        grid_spec=pltpu.PrefetchScalarGridSpec(
            num_scalar_prefetch=0,
            grid=grid,
            in_specs=[
                pl.BlockSpec((tm, d_model_pad), lambda i, h: (i, 0)),       # x row tile
                pl.BlockSpec((d_model_pad, 2 * th), lambda i, h: (0, h)),   # fused [Wg|Wh] tile
                pl.BlockSpec((th, d_model_pad), lambda i, h: (h, 0)),       # Wo tile
            ],
            out_specs=pl.BlockSpec((tm, d_model_pad), lambda i, h: (i, 0)),
            scratch_shapes=[pltpu.VMEM((tm, d_model_pad), jnp.float32)],
        ),
        compiler_params=pltpu.CompilerParams(
            dimension_semantics=("parallel", "arbitrary"),
            vmem_limit_bytes=vmem_limit,
        ),
        cost_estimate=pl.CostEstimate(
            flops=flops, transcendentals=transcendentals, bytes_accessed=bytes_accessed),
    )(x2, wgh, wo_t)

    return out2[:n, :d_model].reshape(batch, seq, d_model)


def swiglu_ref(x, w_gate, w_hidden, w_out):
    g = x @ w_gate.T
    h = x @ w_hidden.T
    return (jax.nn.silu(g) * h) @ w_out.T


if __name__ == "__main__":
    batch, seq, d_model = 2, 8, 32
    d_hidden = 4 * d_model  # default d_hidden = 4 * d_model

    key = jax.random.PRNGKey(0)
    kx, kg, kh, ko = jax.random.split(key, 4)

    x = jax.random.normal(kx, (batch, seq, d_model), dtype=jnp.float32)
    # Deterministic init mirroring nn.Linear's U(-1/sqrt(fan_in), 1/sqrt(fan_in))
    w_gate = jax.random.uniform(kg, (d_hidden, d_model), jnp.float32,
                                -1.0 / sqrt(d_model), 1.0 / sqrt(d_model))
    w_hidden = jax.random.uniform(kh, (d_hidden, d_model), jnp.float32,
                                  -1.0 / sqrt(d_model), 1.0 / sqrt(d_model))
    w_out = jax.random.uniform(ko, (d_model, d_hidden), jnp.float32,
                               -1.0 / sqrt(d_hidden), 1.0 / sqrt(d_hidden))

    out = swiglu_pallas(x, w_gate, w_hidden, w_out)
    out = jax.block_until_ready(out)

    ref = swiglu_ref(x, w_gate, w_hidden, w_out)
    assert out.shape == (batch, seq, d_model)
    assert jnp.allclose(out, ref, atol=1e-4, rtol=1e-4), "mismatch vs reference"

    print("KERNEL_OK")
</pallas_src>

<mosaic_0001>
module attributes {stable_mosaic.version = 11 : i64} {
  func.func @_swiglu_kernel(%arg0: i32, %arg1: i32, %arg2: memref<16x128xf32, #tpu.memory_space<vmem>>, %arg3: memref<128x256xf32, #tpu.memory_space<vmem>>, %arg4: memref<128x128xf32, #tpu.memory_space<vmem>>, %arg5: memref<16x128xf32, #tpu.memory_space<vmem>>, %arg6: memref<16x128xf32, #tpu.memory_space<vmem>>) attributes {dimension_semantics = [#tpu.dimension_semantics<parallel>, #tpu.dimension_semantics<arbitrary>], iteration_bounds = array<i64: 1, 1>, scalar_prefetch = 0 : i64, scratch_operands = 1 : i64, tpu.core_type = #tpu.core_type<tc>, window_params = [{transform_indices = @transform_0, window_bounds = array<i64: 16, 128>}, {transform_indices = @transform_1, window_bounds = array<i64: 128, 256>}, {transform_indices = @transform_2, window_bounds = array<i64: 128, 128>}, {transform_indices = @transform_3, window_bounds = array<i64: 16, 128>}]} {
    %c0_i32 = arith.constant 0 : i32
    %0 = arith.cmpi eq, %arg1, %c0_i32 : i32
    %1 = arith.extui %0 : i1 to i32
    %c0_i32_0 = arith.constant 0 : i32
    %2 = arith.cmpi ne, %1, %c0_i32_0 : i32
    scf.if %2 {
      %cst_14 = arith.constant 0.000000e+00 : f32
      %23 = vector.broadcast %cst_14 : f32 to vector<16x128xf32>
      %c0_15 = arith.constant 0 : index
      %c0_16 = arith.constant 0 : index
      %24 = vector.load %arg6[%c0_15, %c0_16] : memref<16x128xf32, #tpu.memory_space<vmem>>, vector<16x128xf32>
      tpu.vector_store %arg6[%c0_15, %c0_16], %23 {strides = array<i32>} : memref<16x128xf32, #tpu.memory_space<vmem>>, vector<16x128xf32>,
    } else {
    }
    %c0 = arith.constant 0 : index
    %c0_1 = arith.constant 0 : index
    %3 = vector.load %arg2[%c0, %c0_1] : memref<16x128xf32, #tpu.memory_space<vmem>>, vector<16x128xf32>
    %c0_2 = arith.constant 0 : index
    %c0_3 = arith.constant 0 : index
    %4 = vector.load %arg3[%c0_2, %c0_3] : memref<128x256xf32, #tpu.memory_space<vmem>>, vector<128x256xf32>
    %cst = arith.constant dense<0.000000e+00> : vector<16x256xf32>
    %5 = tpu.matmul %3, %4, %cst {dimension_numbers = #tpu.dot_dimension_numbers<[1], [0], [0], [1], [0, 0, 1, 1], [], []>} : vector<16x128xf32>, vector<128x256xf32>, vector<16x256xf32> -> vector<16x256xf32>
    %6 = vector.extract_strided_slice %5 {offsets = [0, 0], sizes = [16, 128], strides = [1, 1]} : vector<16x256xf32> to vector<16x128xf32>
    %7 = vector.extract_strided_slice %5 {offsets = [0, 128], sizes = [16, 128], strides = [1, 1]} : vector<16x256xf32> to vector<16x128xf32>
    %8 = arith.negf %6 : vector<16x128xf32>
    %9 = math.exp %8 : vector<16x128xf32>
    %cst_4 = arith.constant 1.000000e+00 : f32
    %10 = vector.broadcast %cst_4 : f32 to vector<16x128xf32>
    %11 = arith.addf %10, %9 : vector<16x128xf32>
    %12 = arith.divf %10, %11 : vector<16x128xf32>
    %13 = arith.mulf %6, %12 : vector<16x128xf32>
    %14 = arith.mulf %13, %7 : vector<16x128xf32>
    %c0_5 = arith.constant 0 : index
    %c0_6 = arith.constant 0 : index
    %15 = vector.load %arg6[%c0_5, %c0_6] : memref<16x128xf32, #tpu.memory_space<vmem>>, vector<16x128xf32>
    %c0_7 = arith.constant 0 : index
    %c0_8 = arith.constant 0 : index
    %16 = vector.load %arg4[%c0_7, %c0_8] : memref<128x128xf32, #tpu.memory_space<vmem>>, vector<128x128xf32>
    %cst_9 = arith.constant dense<0.000000e+00> : vector<16x128xf32>
    %17 = tpu.matmul %14, %16, %cst_9 {dimension_numbers = #tpu.dot_dimension_numbers<[1], [0], [0], [1], [0, 0, 1, 1], [], []>} : vector<16x128xf32>, vector<128x128xf32>, vector<16x128xf32> -> vector<16x128xf32>
    %18 = arith.addf %15, %17 : vector<16x128xf32>
    %c0_10 = arith.constant 0 : index
    %c0_11 = arith.constant 0 : index
    %19 = vector.load %arg6[%c0_10, %c0_11] : memref<16x128xf32, #tpu.memory_space<vmem>>, vector<16x128xf32>
    tpu.vector_store %arg6[%c0_10, %c0_11], %18 {strides = array<i32>} : memref<16x128xf32, #tpu.memory_space<vmem>>, vector<16x128xf32>,
    %c0_i32_12 = arith.constant 0 : i32
    %20 = arith.cmpi eq, %arg1, %c0_i32_12 : i32
    %21 = arith.extui %20 : i1 to i32
    %c0_i32_13 = arith.constant 0 : i32
    %22 = arith.cmpi ne, %21, %c0_i32_13 : i32
    scf.if %22 {
      %c0_14 = arith.constant 0 : index
      %c0_15 = arith.constant 0 : index
      %23 = vector.load %arg6[%c0_14, %c0_15] : memref<16x128xf32, #tpu.memory_space<vmem>>, vector<16x128xf32>
      %c0_16 = arith.constant 0 : index
      %c0_17 = arith.constant 0 : index
      %24 = vector.load %arg5[%c0_16, %c0_17] : memref<16x128xf32, #tpu.memory_space<vmem>>, vector<16x128xf32>
      tpu.vector_store %arg5[%c0_16, %c0_17], %23 {strides = array<i32>} : memref<16x128xf32, #tpu.memory_space<vmem>>, vector<16x128xf32>,
    } else {
    }
    return
  }
  func.func @transform_0(%arg0: i32, %arg1: i32) -> (i32, i32) {
    %c0_i32 = arith.constant 0 : i32
    %c0_i32_0 = arith.constant 0 : i32
    return %arg0, %c0_i32 : i32, i32
  }
  func.func @transform_1(%arg0: i32, %arg1: i32) -> (i32, i32) {
    %c0_i32 = arith.constant 0 : i32
    %c0_i32_0 = arith.constant 0 : i32
    return %c0_i32, %arg1 : i32, i32
  }
  func.func @transform_2(%arg0: i32, %arg1: i32) -> (i32, i32) {
    %c0_i32 = arith.constant 0 : i32
    %c0_i32_0 = arith.constant 0 : i32
    return %arg1, %c0_i32 : i32, i32
  }
  func.func @transform_3(%arg0: i32, %arg1: i32) -> (i32, i32) {
    %c0_i32 = arith.constant 0 : i32
    %c0_i32_0 = arith.constant 0 : i32
    return %arg0, %c0_i32 : i32, i32
  }
}

</mosaic_0001>

<llo_original>
// kernel: tpu_custom_call.1
$region0: #{tpu_custom_call.1}
  #allocation0 [shape = 'u32[]', space=smem, size = 0x4, offset = 0x4, fixed_abs, tag = 'smem constant byte address 0x4 - core index']
  #allocation1 [shape = 'u32[72,128]{1,0:T(1,128)}', space=vmem, size = 0x9000, scoped, tag = 'internal scratch']
  #allocation2 [shape = 'f32[16,128]{1,0:T(8,128)}', space=vmem, size = 0x2000, scoped, tag = 'scratch operand']
  %s0 = inlined_call_operand.hbm [shape: f32[16,128], index: 0, kind: input, shape index: {}]
  %s1 = inlined_call_operand.hbm [shape: f32[128,256], index: 1, kind: input, shape index: {}]
  %s2 = inlined_call_operand.hbm [shape: f32[128,128], index: 2, kind: input, shape index: {}]
  %s3 = inlined_call_operand.hbm [shape: f32[16,128], index: 3, kind: output, shape index: {}]
  %s4 = sld [smem:[#allocation0]]
  $region42: #{tpu_custom_call.1} parent=0
    _
  %s6 = ssub.s32 1, %s4
  %s7 = scalar_select 0, %s6, %s4
  $region1: #{tpu_custom_call.1} parent=0
    #allocation3 [shape = 'u8[8192]{0}', space=vmem, size = 0x2000, scoped, tag = 'input window, operand 0, single buffered']
    #allocation4 [shape = 's32[1]{0}', space=sflag, size = 0x4, scoped, tag = 'scoped memory for tpu_custom_call.1']
    #allocation5 [shape = 's32[1]{0}', space=sflag, size = 0x4, scoped, tag = 'scoped memory for tpu_custom_call.1']
    #allocation6 [shape = 'u8[131072]{0}', space=vmem, size = 0x20000, scoped, tag = 'input window, operand 1, single buffered']
    #allocation7 [shape = 's32[1]{0}', space=sflag, size = 0x4, scoped, tag = 'scoped memory for tpu_custom_call.1']
    #allocation8 [shape = 'u8[65536]{0}', space=vmem, size = 0x10000, scoped, tag = 'input window, operand 2, single buffered']
    #allocation9 [shape = 'u8[8192]{0}', space=vmem, size = 0x2000, scoped, tag = 'output window, operand 0, single buffered']
    %8 = vsyncpa [#allocation4], 0
    %9 = vsyncpa [#allocation7], 0
    %10 = vsyncpa [#allocation5], 0
    // Predicated region
    $region2: #{tpu_custom_call.1} parent=1 // pred_check
      _
    $region3: #{tpu_custom_call.1} parent=1 // pred_check_branch
      %12 = sbr.rel (0) target = $region5
    $region4: #{tpu_custom_call.1} parent=1 // pred_region
      %14 = vsyncadd [#allocation4], 0
      %s15 = sshll.u32 %s0, 4
      %s16 = int_to_ptr.hbm [resolvable:$true] %s15
      %s17 = sshll.u32 [#allocation3], 4
      %s18 = int_to_ptr.vmem [resolvable:$true] %s17
      %23 = dma.hbm_to_vmem [thread:$0]  %s16, 256, %s18, [#allocation4], 128, 128, 8
    $region5: #{tpu_custom_call.1} parent=1 // pred_fallthru
      _
    // Predicated region
    $region6: #{tpu_custom_call.1} parent=1 // pred_check
      _
    $region7: #{tpu_custom_call.1} parent=1 // pred_check_branch
      %25 = sbr.rel (0) target = $region9
    $region8: #{tpu_custom_call.1} parent=1 // pred_region
      %27 = vsyncadd [#allocation7], 0
      %s28 = sshll.u32 %s1, 4
      %s29 = int_to_ptr.hbm [resolvable:$true] %s28
      %s30 = sshll.u32 [#allocation6], 4
      %s31 = int_to_ptr.vmem [resolvable:$true] %s30
      %36 = dma.hbm_to_vmem [thread:$0]  %s29, 4096, %s31, [#allocation7], 256, 256, 16
    $region9: #{tpu_custom_call.1} parent=1 // pred_fallthru
      _
    // Predicated region
    $region10: #{tpu_custom_call.1} parent=1 // pred_check
      _
    $region11: #{tpu_custom_call.1} parent=1 // pred_check_branch
      %38 = sbr.rel (0) target = $region13
    $region12: #{tpu_custom_call.1} parent=1 // pred_region
      %40 = vsyncadd [#allocation7], 0
      %s41 = sshll.u32 %s2, 4
      %s42 = int_to_ptr.hbm [resolvable:$true] %s41
      %s43 = sshll.u32 [#allocation8], 4
      %s44 = int_to_ptr.vmem [resolvable:$true] %s43
      %49 = dma.hbm_to_vmem [thread:$0]  %s42, 2048, %s44, [#allocation7], 128, 128, 8
    $region13: #{tpu_custom_call.1} parent=1 // pred_fallthru
      _
    // Predicated region
    $region14: #{tpu_custom_call.1} parent=1 // pred_check
      _
    $region15: #{tpu_custom_call.1} parent=1 // pred_check_branch
      %51 = sbr.rel (0) target = $region17
    $region16: #{tpu_custom_call.1} parent=1 // pred_region
      %53 = dma.done [#allocation4], 256
    $region17: #{tpu_custom_call.1} parent=1 // pred_fallthru
      _
    // Predicated region
    $region18: #{tpu_custom_call.1} parent=1 // pred_check
      _
    $region19: #{tpu_custom_call.1} parent=1 // pred_check_branch
      %55 = sbr.rel (0) target = $region21
    $region20: #{tpu_custom_call.1} parent=1 // pred_region
      %57 = dma.done [#allocation7], 4096
    $region21: #{tpu_custom_call.1} parent=1 // pred_fallthru
      _
    // Predicated region
    $region22: #{tpu_custom_call.1} parent=1 // pred_check
      _
    $region23: #{tpu_custom_call.1} parent=1 // pred_check_branch
      %59 = sbr.rel (0) target = $region25
    $region24: #{tpu_custom_call.1} parent=1 // pred_region
      %61 = dma.done [#allocation7], 2048
    $region25: #{tpu_custom_call.1} parent=1 // pred_fallthru
      _
    %p62 = scmp.eq.s32.totalorder 0, 0
    // Predicated region
    $region26: #{tpu_custom_call.1} parent=1 // pred_check
      %p63 = pneg %p62
    $region27: #{tpu_custom_call.1} parent=1 // pred_check_branch
      %65 = sbr.rel (%p63) target = $region29
    $region28: #{tpu_custom_call.1} parent=1 // pred_region
      %66 = vst [vmem:[#allocation2] sm:$0xff] 0.0
      %67 = vst [vmem:[#allocation2 + $0x8] sm:$0xff] 0.0
    $region29: #{tpu_custom_call.1} parent=1 // pred_fallthru
      _
    %v68 = vld [vmem:[#allocation3] sm:$0xff]
    %v69 = vld [vmem:[#allocation3 + $0x8] sm:$0xff]
    %v70 = vld [vmem:[#allocation6] sm:$0xff]
    %v71 = vld [vmem:[#allocation6 + $0x8] sm:$0xff]
    %v72 = vld [vmem:[#allocation6 + $0x10] sm:$0xff]
    %v73 = vld [vmem:[#allocation6 + $0x18] sm:$0xff]
    %v74 = vld [vmem:[#allocation6 + $0x20] sm:$0xff]
    %v75 = vld [vmem:[#allocation6 + $0x28] sm:$0xff]
    %v76 = vld [vmem:[#allocation6 + $0x30] sm:$0xff]
    %v77 = vld [vmem:[#allocation6 + $0x38] sm:$0xff]
    %v78 = vld [vmem:[#allocation6 + $0x40] sm:$0xff]
    %v79 = vld [vmem:[#allocation6 + $0x48] sm:$0xff]
    %v80 = vld [vmem:[#allocation6 + $0x50] sm:$0xff]
    %v81 = vld [vmem:[#allocation6 + $0x58] sm:$0xff]
    %v82 = vld [vmem:[#allocation6 + $0x60] sm:$0xff]
    %v83 = vld [vmem:[#allocation6 + $0x68] sm:$0xff]
    %v84 = vld [vmem:[#allocation6 + $0x70] sm:$0xff]
    %v85 = vld [vmem:[#allocation6 + $0x78] sm:$0xff]
    %v86 = vld [vmem:[#allocation6 + $0x80] sm:$0xff]
    %v87 = vld [vmem:[#allocation6 + $0x88] sm:$0xff]
    %v88 = vld [vmem:[#allocation6 + $0x90] sm:$0xff]
    %v89 = vld [vmem:[#allocation6 + $0x98] sm:$0xff]
    %v90 = vld [vmem:[#allocation6 + $0xa0] sm:$0xff]
    %v91 = vld [vmem:[#allocation6 + $0xa8] sm:$0xff]
    %v92 = vld [vmem:[#allocation6 + $0xb0] sm:$0xff]
    %v93 = vld [vmem:[#allocation6 + $0xb8] sm:$0xff]
    %v94 = vld [vmem:[#allocation6 + $0xc0] sm:$0xff]
    %v95 = vld [vmem:[#allocation6 + $0xc8] sm:$0xff]
    %v96 = vld [vmem:[#allocation6 + $0xd0] sm:$0xff]
    %v97 = vld [vmem:[#allocation6 + $0xd8] sm:$0xff]
    %v98 = vld [vmem:[#allocation6 + $0xe0] sm:$0xff]
    %v99 = vld [vmem:[#allocation6 + $0xe8] sm:$0xff]
    %v100 = vld [vmem:[#allocation6 + $0xf0] sm:$0xff]
    %v101 = vld [vmem:[#allocation6 + $0xf8] sm:$0xff]
    %102 = vmatpush.msra.mxu0 %v100
    %103 = vmatpush.msra.mxu0 %v98
    %104 = vmatpush.msra.mxu0 %v96
    %105 = vmatpush.msra.mxu0 %v94
    %106 = vmatpush.msra.mxu0 %v92
    %107 = vmatpush.msra.mxu0 %v90
    %108 = vmatpush.msra.mxu0 %v88
    %109 = vmatpush.msra.mxu0 %v86
    %110 = vmatpush.msra.mxu0 %v84
    %111 = vmatpush.msra.mxu0 %v82
    %112 = vmatpush.msra.mxu0 %v80
    %113 = vmatpush.msra.mxu0 %v78
    %114 = vmatpush.msra.mxu0 %v76
    %115 = vmatpush.msra.mxu0 %v74
    %116 = vmatpush.msra.mxu0 %v72
    %117 = vmatpush.msra.mxu0 %v70
    %118 = vmatmul.f32.gmra.mxu0 %v68
    %v119 = vpop.f32.mrf.mxu0
    %v120 = vadd.f32 0.0, %v119
    %121 = vmatmul.f32.gmra.mxu0 %v69
    %v122 = vpop.f32.mrf.mxu0
    %v123 = vadd.f32 0.0, %v122
    %124 = vdwg.mxu0
    %125 = vmatpush.msra.mxu0 %v101
    %126 = vmatpush.msra.mxu0 %v99
    %127 = vmatpush.msra.mxu0 %v97
    %128 = vmatpush.msra.mxu0 %v95
    %129 = vmatpush.msra.mxu0 %v93
    %130 = vmatpush.msra.mxu0 %v91
    %131 = vmatpush.msra.mxu0 %v89
    %132 = vmatpush.msra.mxu0 %v87
    %133 = vmatpush.msra.mxu0 %v85
    %134 = vmatpush.msra.mxu0 %v83
    %135 = vmatpush.msra.mxu0 %v81
    %136 = vmatpush.msra.mxu0 %v79
    %137 = vmatpush.msra.mxu0 %v77
    %138 = vmatpush.msra.mxu0 %v75
    %139 = vmatpush.msra.mxu0 %v73
    %140 = vmatpush.msra.mxu0 %v71
    %141 = vmatmul.f32.gmra.mxu0 %v68
    %v142 = vpop.f32.mrf.mxu0
    %v143 = vadd.f32 0.0, %v142
    %144 = vmatmul.f32.gmra.mxu0 %v69
    %v145 = vpop.f32.mrf.mxu0
    %v146 = vadd.f32 0.0, %v145
    %147 = vdwg.mxu0
    %v148 = vxor.u32 %v120, 2147483648
    %v149 = vxor.u32 %v123, 2147483648
    %v150 = vmul.f32 %v148, 1.442695
    %v151 = vpow.pop %v150
    %v152 = vmul.f32 %v149, 1.442695
    %v153 = vpow.pop %v152
    %v154 = vadd.f32 %v151, 1.0
    %v155 = vadd.f32 %v153, 1.0
    %v156 = vrcp.pop %v154
    %v157 = vmul.f32 %v154, %v156
    %v158 = vsub.f32 1.0, %v157
    %v159 = vmul.f32 %v156, %v158
    %v160 = vadd.f32 %v156, %v159
    %vm161 = vweird.f32 %v154
    %vm162 = vweird.f32 %v156
    %vm163 = vmor %vm161, %vm162
    %v164 = vsel %vm163, %v156, %v160
    %v165 = vand.u32 2147483647, %v154
    %vm166 = vcmp.eq.f32.partialorder %v165, 8.507059e+37
    %v167 = vand.u32 %v154, 2147483648
    %v168 = vor.u32 1.1754944e-38, %v167
    %v169 = vsel %vm166, %v168, %v164
    %v170 = vmul.f32 1.0, %v169
    %v171 = vrcp.pop %v155
    %v172 = vmul.f32 %v155, %v171
    %v173 = vsub.f32 1.0, %v172
    %v174 = vmul.f32 %v171, %v173
    %v175 = vadd.f32 %v171, %v174
    %vm176 = vweird.f32 %v155
    %vm177 = vweird.f32 %v171
    %vm178 = vmor %vm176, %vm177
    %v179 = vsel %vm178, %v171, %v175
    %v180 = vand.u32 2147483647, %v155
    %vm181 = vcmp.eq.f32.partialorder %v180, 8.507059e+37
    %v182 = vand.u32 %v155, 2147483648
    %v183 = vor.u32 1.1754944e-38, %v182
    %v184 = vsel %vm181, %v183, %v179
    %v185 = vmul.f32 1.0, %v184
    %v186 = vmul.f32 %v120, %v170
    %v187 = vmul.f32 %v123, %v185
    %v188 = vmul.f32 %v186, %v143
    %v189 = vmul.f32 %v187, %v146
    %v190 = vld [vmem:[#allocation2] sm:$0xff]
    %v191 = vld [vmem:[#allocation2 + $0x8] sm:$0xff]
    %v192 = vld [vmem:[#allocation8] sm:$0xff]
    %v193 = vld [vmem:[#allocation8 + $0x8] sm:$0xff]
    %v194 = vld [vmem:[#allocation8 + $0x10] sm:$0xff]
    %v195 = vld [vmem:[#allocation8 + $0x18] sm:$0xff]
    %v196 = vld [vmem:[#allocation8 + $0x20] sm:$0xff]
    %v197 = vld [vmem:[#allocation8 + $0x28] sm:$0xff]
    %v198 = vld [vmem:[#allocation8 + $0x30] sm:$0xff]
    %v199 = vld [vmem:[#allocation8 + $0x38] sm:$0xff]
    %v200 = vld [vmem:[#allocation8 + $0x40] sm:$0xff]
    %v201 = vld [vmem:[#allocation8 + $0x48] sm:$0xff]
    %v202 = vld [vmem:[#allocation8 + $0x50] sm:$0xff]
    %v203 = vld [vmem:[#allocation8 + $0x58] sm:$0xff]
    %v204 = vld [vmem:[#allocation8 + $0x60] sm:$0xff]
    %v205 = vld [vmem:[#allocation8 + $0x68] sm:$0xff]
    %v206 = vld [vmem:[#allocation8 + $0x70] sm:$0xff]
    %v207 = vld [vmem:[#allocation8 + $0x78] sm:$0xff]
    %208 = vmatpush.msra.mxu0 %v207
    %209 = vmatpush.msra.mxu0 %v206
    %210 = vmatpush.msra.mxu0 %v205
    %211 = vmatpush.msra.mxu0 %v204
    %212 = vmatpush.msra.mxu0 %v203
    %213 = vmatpush.msra.mxu0 %v202
    %214 = vmatpush.msra.mxu0 %v201
    %215 = vmatpush.msra.mxu0 %v200
    %216 = vmatpush.msra.mxu0 %v199
    %217 = vmatpush.msra.mxu0 %v198
    %218 = vmatpush.msra.mxu0 %v197
    %219 = vmatpush.msra.mxu0 %v196
    %220 = vmatpush.msra.mxu0 %v195
    %221 = vmatpush.msra.mxu0 %v194
    %222 = vmatpush.msra.mxu0 %v193
    %223 = vmatpush.msra.mxu0 %v192
    %224 = vmatmul.f32.gmra.mxu0 %v188
    %v225 = vpop.f32.mrf.mxu0
    %v226 = vadd.f32 0.0, %v225
    %227 = vmatmul.f32.gmra.mxu0 %v189
    %v228 = vpop.f32.mrf.mxu0
    %v229 = vadd.f32 0.0, %v228
    %230 = vdwg.mxu0
    %v231 = vadd.f32 %v190, %v226
    %v232 = vadd.f32 %v191, %v229
    %233 = vst [vmem:[#allocation2] sm:$0xff] %v231
    %234 = vst [vmem:[#allocation2 + $0x8] sm:$0xff] %v232
    // Predicated region
    $region30: #{tpu_custom_call.1} parent=1 // pred_check
      %p235 = pneg %p62
    $region31: #{tpu_custom_call.1} parent=1 // pred_check_branch
      %237 = sbr.rel (%p235) target = $region33
    $region32: #{tpu_custom_call.1} parent=1 // pred_region
      %v238 = vld [vmem:[#allocation2] sm:$0xff]
      %v239 = vld [vmem:[#allocation2 + $0x8] sm:$0xff]
      %240 = vst [vmem:[#allocation9] sm:$0xff] %v238
      %241 = vst [vmem:[#allocation9 + $0x8] sm:$0xff] %v239
    $region33: #{tpu_custom_call.1} parent=1 // pred_fallthru
      _
    // Predicated region
    $region34: #{tpu_custom_call.1} parent=1 // pred_check
      _
    $region35: #{tpu_custom_call.1} parent=1 // pred_check_branch
      %243 = sbr.rel (0) target = $region37
    $region36: #{tpu_custom_call.1} parent=1 // pred_region
      %245 = vsyncadd [#allocation5], 0
      %s246 = sshll.u32 [#allocation9], 4
      %s247 = int_to_ptr.vmem [resolvable:$true] %s246
      %s248 = sshll.u32 %s3, 4
      %s249 = int_to_ptr.hbm [resolvable:$true] %s248
      %254 = dma.vmem_to_hbm [thread:$0]  %s247, 256, %s249, [#allocation5], 128, 128, 8
    $region37: #{tpu_custom_call.1} parent=1 // pred_fallthru
      _
    // Predicated region
    $region38: #{tpu_custom_call.1} parent=1 // pred_check
      _
    $region39: #{tpu_custom_call.1} parent=1 // pred_check_branch
      %256 = sbr.rel (0) target = $region41
    $region40: #{tpu_custom_call.1} parent=1 // pred_region
      %258 = dma.done [#allocation5], 256
    $region41: #{tpu_custom_call.1} parent=1 // pred_fallthru
      _
    %259 = vsyncpa [#allocation4], 1
    %260 = vsyncpa [#allocation7], 1
    %261 = vsyncpa [#allocation5], 1

</llo_original>
